<compile_context>
chip_gen: v6e
topology: v6e:2x2x1
jax: 0.10.0
libtpu: 0.0.40
codegen_flags: <defaults>
</compile_context>

<pallas_src>
import functools

import jax
import jax.numpy as jnp
from jax.experimental import pallas as pl
from jax.experimental.pallas import tpu as pltpu


_LANE = 128
_VMEM_LIMIT_CAP = 48 * 1024 * 1024           # leaves headroom even on v7x (64 MiB)
_RESIDENT_SUPPORT_BUDGET = 32 * 1024 * 1024  # 2x (possibly double-buffered) support


def _round_up(v, m):
    return ((v + m - 1) // m) * m


def padded_num_nodes(n):
    """Row/col padding rule for the adjacency (256-aligned for v6e/v7x MXU)."""
    return _round_up(n, 128) if n <= 128 else _round_up(n, 256)


def _pad_to(x, rows, cols):
    r, c = x.shape
    return jnp.pad(x, ((0, rows - r), (0, cols - c)))


def _pick_tile(dim, max_tile=512, granule=128):
    """Largest multiple of `granule` <= max_tile that divides `dim`."""
    t = min(max_tile, dim)
    t -= t % granule
    t = max(t, granule)
    while dim % t:
        t -= granule
    return t


def _pick_row_tile(dim, max_tile=512):
    t = _pick_tile(dim, max_tile)
    # Prefer >=2 row tiles so "parallel" can shard rows over v7x's 2 TensorCores.
    if dim // t < 2 and t > 128:
        t = _pick_tile(dim, t // 2)
    return t


# --------------------------------------------------------------------------- #
# Stage 1: support = X @ W   (full-K block, W resident, no reduction grid axis) #
# --------------------------------------------------------------------------- #
def _xw_kernel(x_ref, w_ref, o_ref):
    o_ref[...] = jnp.dot(
        x_ref[...].astype(jnp.bfloat16), w_ref[...].astype(jnp.bfloat16),
        preferred_element_type=jnp.float32).astype(o_ref.dtype)


def _support_matmul(x_p, w_p, *, tm):
    m, k = x_p.shape
    _, n = w_p.shape
    flops = 2 * m * k * n
    bytes_accessed = (x_p.size * x_p.dtype.itemsize
                      + w_p.size * w_p.dtype.itemsize
                      + m * n * 2)
    return pl.pallas_call(
        _xw_kernel,
        out_shape=jax.ShapeDtypeStruct((m, n), jnp.bfloat16),
        grid_spec=pltpu.PrefetchScalarGridSpec(
            num_scalar_prefetch=0,
            grid=(m // tm,),
            in_specs=[pl.BlockSpec((tm, k), lambda i: (i, 0)),
                      pl.BlockSpec((k, n), lambda i: (0, 0))],   # W resident
            out_specs=pl.BlockSpec((tm, n), lambda i: (i, 0))),
        compiler_params=pltpu.CompilerParams(
            dimension_semantics=("parallel",)),
        cost_estimate=pl.CostEstimate(flops=flops, transcendentals=0,
                                      bytes_accessed=bytes_accessed),
    )(x_p, w_p)


# --------------------------------------------------------------------------- #
# Stage 2: out = relu(adj @ support)  (adj streamed, support resident if it fits) #
# --------------------------------------------------------------------------- #
def _adj_matmul_kernel(a_ref, s_ref, o_ref, acc_ref, *, block_k, apply_relu):
    k = pl.program_id(1)

    @pl.when(k == 0)
    def _():
        acc_ref[...] = jnp.zeros_like(acc_ref)

    a = a_ref[...].astype(jnp.bfloat16)          # per-tile cast (free on the VPU)
    if s_ref.shape[0] == block_k:                # streamed (tk, N) support block
        s = s_ref[...]
    else:                                        # fully VMEM-resident support
        ks = pl.multiple_of(k * block_k, block_k)
        s = s_ref[pl.ds(ks, block_k), :]
    acc_ref[...] += jnp.dot(a, s, preferred_element_type=jnp.float32)

    @pl.when(k == pl.num_programs(1) - 1)
    def _():
        r = acc_ref[...]
        if apply_relu:
            r = jnp.maximum(r, 0.0)
        o_ref[...] = r.astype(o_ref.dtype)


def _adj_matmul(a_p, support, *, tm, tk, apply_relu=True, out_dtype=jnp.float32):
    m, kdim = a_p.shape
    k2, n = support.shape
    assert kdim == k2 and m % tm == 0 and kdim % tk == 0

    support_bytes = support.size * support.dtype.itemsize
    resident = 2 * support_bytes <= _RESIDENT_SUPPORT_BUDGET
    if resident:
        s_spec = pl.BlockSpec((kdim, n), lambda i, k: (0, 0))    # fetched once
        s_traffic = support_bytes
    else:
        s_spec = pl.BlockSpec((tk, n), lambda i, k: (k, 0))      # per-row-tile restream
        s_traffic = (m // tm) * support_bytes

    a_bytes = a_p.size * a_p.dtype.itemsize
    out_bytes = m * n * jnp.dtype(out_dtype).itemsize
    flops = 2 * m * kdim * n

    vmem_need = (2 * tm * tk * a_p.dtype.itemsize
                 + 2 * (support_bytes if resident
                        else tk * n * support.dtype.itemsize)
                 + tm * n * 4
                 + 2 * tm * n * jnp.dtype(out_dtype).itemsize)
    vmem_limit = min(max(vmem_need + (8 << 20), 32 << 20), _VMEM_LIMIT_CAP)

    return pl.pallas_call(
        functools.partial(_adj_matmul_kernel, block_k=tk, apply_relu=apply_relu),
        out_shape=jax.ShapeDtypeStruct((m, n), out_dtype),
        grid_spec=pltpu.PrefetchScalarGridSpec(
            num_scalar_prefetch=0,
            grid=(m // tm, kdim // tk),
            in_specs=[pl.BlockSpec((tm, tk), lambda i, k: (i, k)), s_spec],
            out_specs=pl.BlockSpec((tm, n), lambda i, k: (i, 0)),
            scratch_shapes=[pltpu.VMEM((tm, n), jnp.float32)]),
        compiler_params=pltpu.CompilerParams(
            dimension_semantics=("parallel", "arbitrary"),
            vmem_limit_bytes=vmem_limit),
        cost_estimate=pl.CostEstimate(flops=flops, transcendentals=0,
                                      bytes_accessed=a_bytes + s_traffic + out_bytes),
    )(a_p, support)


# --------------------------------------------------------------------------- #
# GraphConvolution forward wrapper                                              #
# --------------------------------------------------------------------------- #
def graph_convolution(x, adj, weight):
    """Eval-mode GraphConvolution: relu(adj @ (dropout(x) @ weight)).

    x:      [N, F_in]    float32
    adj:    [N, N] dense, or already padded to [padded_num_nodes(N)]^2 (any float
            dtype; the kernel casts it to bf16 per tile, avoiding a pre-pass)
    weight: [F_in, F_out] float32
    """
    n, f_in = x.shape
    f_out = weight.shape[1]
    n_pad = padded_num_nodes(n)
    f_out_pad = _round_up(f_out, _LANE)

    tm = _pick_row_tile(n_pad)    # output-row tile (>=2 tiles when possible)
    tk = _pick_tile(n_pad)        # contraction tile (large -> less acc RMW on v5e)

    # Stage-1 operands: F_in stays unpadded (full-K block), rows padded to n_pad.
    x_p = _pad_to(x, n_pad, f_in).astype(jnp.bfloat16)
    w_p = _pad_to(weight, f_in, f_out_pad).astype(jnp.bfloat16)

    # Adjacency: reuse as-is when already padded; otherwise pad+cast once (fused).
    if adj.shape == (n_pad, n_pad):
        a_p = adj
    elif adj.shape == (n, n):
        a_p = _pad_to(adj, n_pad, n_pad).astype(jnp.bfloat16)
    else:
        raise ValueError(f"adj must be ({n},{n}) or ({n_pad},{n_pad}); got {adj.shape}")

    support = _support_matmul(x_p, w_p, tm=tm)          # [n_pad, f_out_pad] bf16
    out_pad = _adj_matmul(a_p, support, tm=tm, tk=tk)   # [n_pad, f_out_pad] f32
    return out_pad[:n, :f_out]


def reference_forward(x, adj, weight):
    """Pure-JAX f32 reference of the eval-mode forward pass."""
    return jnp.maximum(adj @ (x @ weight), 0.0)


def build_gcn_adj(edge_index, edge_weight, num_nodes, *, pad_to=None,
                  dtype=jnp.float32):
    """Demo glue: dense D^-1/2 (A + I) D^-1/2, optionally built already padded and
    in the kernel dtype so no extra pad/cast HBM pass is needed."""
    size = pad_to if pad_to is not None else num_nodes
    src, dst = edge_index[0], edge_index[1]
    loop = jnp.arange(num_nodes, dtype=src.dtype)
    src = jnp.concatenate([src, loop])
    dst = jnp.concatenate([dst, loop])
    w = jnp.concatenate([edge_weight.astype(jnp.float32),
                         jnp.ones(num_nodes, jnp.float32)])
    deg = jnp.zeros((num_nodes,), jnp.float32).at[dst].add(w)
    dinv = jnp.where(deg > 0, jax.lax.rsqrt(deg), 0.0)
    norm = dinv[src] * w * dinv[dst]
    adj = jnp.zeros((size, size), jnp.float32).at[dst, src].add(norm)
    return adj.astype(dtype)


if __name__ == "__main__":
    key = jax.random.PRNGKey(0)
    k_x, k_w, k_e = jax.random.split(key, 3)

    N, F_IN, F_OUT = 200, 48, 96       # small, but exercises padding + multi-tile grid
    N_PAD = padded_num_nodes(N)

    x = jax.random.normal(k_x, (N, F_IN), jnp.float32)

    # xavier_uniform-style weight init (matches reset_parameters scale)
    limit = (6.0 / (F_IN + F_OUT)) ** 0.5
    weight = jax.random.uniform(k_w, (F_IN, F_OUT), jnp.float32, -limit, limit)

    # ring graph, both directions, random positive edge weights
    src = jnp.arange(N, dtype=jnp.int32)
    dst = (src + 1) % N
    edge_index = jnp.stack([jnp.concatenate([src, dst]),
                            jnp.concatenate([dst, src])], axis=0)
    edge_weight = jax.random.uniform(k_e, (edge_index.shape[1],),
                                     jnp.float32, 0.5, 1.5)

    # Adjacency built directly at the padded size in bf16: the stage-2 kernel
    # streams it from HBM with no extra pad/cast pass.
    adj = build_gcn_adj(edge_index, edge_weight, N, pad_to=N_PAD,
                        dtype=jnp.bfloat16)

    out = jax.block_until_ready(graph_convolution(x, adj, weight))
    ref = reference_forward(x, adj.astype(jnp.float32)[:N, :N], weight)

    assert out.shape == (N, F_OUT)
    assert bool(jnp.all(jnp.isfinite(out)))
    assert bool(jnp.allclose(out, ref, rtol=3e-2, atol=3e-2))  # bf16-operand tolerance

    print("KERNEL_OK")
</pallas_src>

<mosaic_0001>
module attributes {stable_mosaic.version = 11 : i64} {
  func.func @_xw_kernel(%arg0: i32, %arg1: memref<128x48xbf16, #tpu.memory_space<vmem>>, %arg2: memref<48x128xbf16, #tpu.memory_space<vmem>>, %arg3: memref<128x128xbf16, #tpu.memory_space<vmem>>) attributes {dimension_semantics = [#tpu.dimension_semantics<parallel>], iteration_bounds = array<i64: 2>, scalar_prefetch = 0 : i64, scratch_operands = 0 : i64, tpu.core_type = #tpu.core_type<tc>, window_params = [{transform_indices = @transform_0, window_bounds = array<i64: 128, 48>}, {pipeline_mode = #tpu.pipeline_mode<synchronous>, transform_indices = @transform_1, window_bounds = array<i64: 48, 128>}, {transform_indices = @transform_2, window_bounds = array<i64: 128, 128>}]} {
    %c0 = arith.constant 0 : index
    %c0_0 = arith.constant 0 : index
    %0 = vector.load %arg1[%c0, %c0_0] : memref<128x48xbf16, #tpu.memory_space<vmem>>, vector<128x48xbf16>
    %c0_1 = arith.constant 0 : index
    %c0_2 = arith.constant 0 : index
    %1 = vector.load %arg2[%c0_1, %c0_2] : memref<48x128xbf16, #tpu.memory_space<vmem>>, vector<48x128xbf16>
    %cst = arith.constant dense<0.000000e+00> : vector<128x128xf32>
    %2 = tpu.matmul %0, %1, %cst {dimension_numbers = #tpu.dot_dimension_numbers<[1], [0], [0], [1], [0, 0, 1, 1], [], []>} : vector<128x48xbf16>, vector<48x128xbf16>, vector<128x128xf32> -> vector<128x128xf32>
    %3 = arith.truncf %2 : vector<128x128xf32> to vector<128x128xbf16>
    %c0_3 = arith.constant 0 : index
    %c0_4 = arith.constant 0 : index
    %4 = vector.load %arg3[%c0_3, %c0_4] : memref<128x128xbf16, #tpu.memory_space<vmem>>, vector<128x128xbf16>
    tpu.vector_store %arg3[%c0_3, %c0_4], %3 {strides = array<i32>} : memref<128x128xbf16, #tpu.memory_space<vmem>>, vector<128x128xbf16>,
    return
  }
  func.func @transform_0(%arg0: i32) -> (i32, i32) {
    %c0_i32 = arith.constant 0 : i32
    %c0_i32_0 = arith.constant 0 : i32
    return %arg0, %c0_i32 : i32, i32
  }
  func.func @transform_1(%arg0: i32) -> (i32, i32) {
    %c0_i32 = arith.constant 0 : i32
    %c0_i32_0 = arith.constant 0 : i32
    %c0_i32_1 = arith.constant 0 : i32
    return %c0_i32, %c0_i32_0 : i32, i32
  }
  func.func @transform_2(%arg0: i32) -> (i32, i32) {
    %c0_i32 = arith.constant 0 : i32
    %c0_i32_0 = arith.constant 0 : i32
    return %arg0, %c0_i32 : i32, i32
  }
}

</mosaic_0001>

<llo_original>
// kernel: tpu_custom_call.1
$region0: #{tpu_custom_call.1}
  #allocation0 [shape = 'u32[]', space=smem, size = 0x4, offset = 0x4, fixed_abs, tag = 'smem constant byte address 0x4 - core index']
  #allocation1 [shape = 'u32[144,128]{1,0:T(1,128)}', space=vmem, size = 0x12000, scoped, tag = 'internal scratch']
  %s0 = inlined_call_operand.vmem [shape: bf16[256,48], index: 0, kind: input, shape index: {}]
  %s1 = inlined_call_operand.vmem [shape: bf16[48,128], index: 1, kind: input, shape index: {}]
  %s2 = inlined_call_operand.hbm [shape: bf16[256,128], index: 2, kind: output, shape index: {}]
  %s3 = sld [smem:[#allocation0]]
  $region41: #{tpu_custom_call.1} parent=0
    _
  %s5 = ssub.s32 1, %s3
  %s6 = scalar_select 0, %s5, %s3
  $region1: #{tpu_custom_call.1} parent=0
    #allocation2 [shape = 'u8[65536]{0}', space=vmem, size = 0x10000, scoped, tag = 'output window, operand 0']
    #allocation3 [shape = 's32[2]{0}', space=sflag, size = 0x8, scoped, tag = 'scoped memory for tpu_custom_call.1']
    %7 = vsyncpa [#allocation3], 0
    %s8 = scalar_lea.sflag [#allocation3], 1
    %9 = vsyncpa %s8, 0
    loop: start=0, step=1, limit=4
    $region2: #{tpu_custom_call.1} parent=1 // loop_pre_header
      _
    $region3: #{tpu_custom_call.1} parent=1 // loop_header
      %s11 = sphi 0, %s15
      %p12 = scmp.ge.s32.totalorder %s11, 4
      %s21 = sphi 0, %s23
      %s24 = sphi 0, %s21
      %s25 = sphi 0, %s24
      %s41 = sphi 0, %s25
      %s45 = sphi 0, %s45
      %s47 = sphi 0, %s45
      %s48 = sphi 0, %s47
      %s62 = sphi 0, %s48
      %s68 = sphi 0, %s70
      %s71 = sphi 0, %s68
      %s72 = sphi 0, %s71
      %s88 = sphi 0, %s72
    $region4: #{tpu_custom_call.1} parent=1 // loop_header_branch
      %14 = sbr.rel (%p12) target = $region8
    $region5: #{tpu_custom_call.1} parent=1 // loop_body
      %s16 = ssub.s32 %s11, 1
      %s17 = ssub.s32 %s11, 2
      %s18 = sadd.s32 %s11, 1
      %s19 = ssub.s32 %s11, %s18
      %p20 = scmp.eq.s32.totalorder %s19, 0
      %s22 = sadd.s32 %s21, 1
      %s23 = scalar_select %p20, %s21, %s22
      %p26 = pneg %p20
      %p27 = scmp.eq.s32.totalorder %s11, 1
      %p28 = por %p26, %p27
      %p29 = scmp.ne.s32.totalorder %s21, %s24
      %p30 = scmp.eq.s32.totalorder %s11, 0
      %p31 = por %p29, %p30
      %p32 = scmp.ne.s32.totalorder %s21, %s24
      %p33 = scmp.eq.s32.totalorder %s16, 1
      %p34 = por %p32, %p33
      %p35 = scmp.ne.s32.totalorder %s24, %s25
      %p36 = scmp.eq.s32.totalorder %s16, 0
      %p37 = por %p35, %p36
      %p38 = scmp.ne.s32.totalorder %s24, %s25
      %p39 = scmp.eq.s32.totalorder %s17, 1
      %p40 = por %p38, %p39
      %p42 = scmp.ne.s32.totalorder %s25, %s41
      %p43 = scmp.eq.s32.totalorder %s17, 0
      %p44 = por %p42, %p43
      %s46 = sadd.s32 %s45, 1
      %p49 = scmp.eq.s32.totalorder %s11, 1
      %p50 = scmp.ne.s32.totalorder %s45, %s47
      %p51 = scmp.eq.s32.totalorder %s11, 0
      %p52 = por %p50, %p51
      %p53 = scmp.ne.s32.totalorder %s45, %s47
      %p54 = scmp.eq.s32.totalorder %s16, 1
      %p55 = por %p53, %p54
      %p56 = scmp.ne.s32.totalorder %s47, %s48
      %p57 = scmp.eq.s32.totalorder %s16, 0
      %p58 = por %p56, %p57
      %p59 = scmp.ne.s32.totalorder %s47, %s48
      %p60 = scmp.eq.s32.totalorder %s17, 1
      %p61 = por %p59, %p60
      %p63 = scmp.ne.s32.totalorder %s48, %s62
      %p64 = scmp.eq.s32.totalorder %s17, 0
      %p65 = por %p63, %p64
      %s66 = ssub.s32 %s11, %s18
      %p67 = scmp.eq.s32.totalorder %s66, 0
      %s69 = sadd.s32 %s68, 1
      %s70 = scalar_select %p67, %s68, %s69
      %p73 = pneg %p67
      %p74 = scmp.eq.s32.totalorder %s11, 1
      %p75 = por %p73, %p74
      %p76 = scmp.ne.s32.totalorder %s68, %s71
      %p77 = scmp.eq.s32.totalorder %s11, 0
      %p78 = por %p76, %p77
      %p79 = scmp.ne.s32.totalorder %s68, %s71
      %p80 = scmp.eq.s32.totalorder %s16, 1
      %p81 = por %p79, %p80
      %p82 = scmp.ne.s32.totalorder %s71, %s72
      %p83 = scmp.eq.s32.totalorder %s16, 0
      %p84 = por %p82, %p83
      %p85 = scmp.ne.s32.totalorder %s71, %s72
      %p86 = scmp.eq.s32.totalorder %s17, 1
      %p87 = por %p85, %p86
      %p89 = scmp.ne.s32.totalorder %s72, %s88
      %p90 = scmp.eq.s32.totalorder %s17, 0
      %p91 = por %p89, %p90
      %p92 = scmp.le.s32.totalorder 1, %s11
      %p93 = scmp.lt.s32.totalorder %s11, 3
      %p94 = pnand %p92, %p93
      %p95 = pneg %p94
      // Predicated region
      $region9: #{tpu_custom_call.1} parent=5 // pred_check
        _
      $region10: #{tpu_custom_call.1} parent=5 // pred_check_branch
        %97 = sbr.rel (%p94) target = $region12
      $region11: #{tpu_custom_call.1} parent=5 // pred_region
        %s98 = ssub.s32 %s11, 1
        // Predicated region
        $region13: #{tpu_custom_call.1} parent=11 // pred_check
          %p99 = pneg %p58
        $region14: #{tpu_custom_call.1} parent=11 // pred_check_branch
          %101 = sbr.rel (%p99) target = $region16
        $region15: #{tpu_custom_call.1} parent=11 // pred_region
          _
        $region16: #{tpu_custom_call.1} parent=11 // pred_fallthru
          _
      $region12: #{tpu_custom_call.1} parent=5 // pred_fallthru
        _
      %p102 = scmp.lt.s32.totalorder %s11, 2
      // Predicated region
      $region17: #{tpu_custom_call.1} parent=5 // pred_check
        %p103 = pneg %p102
      $region18: #{tpu_custom_call.1} parent=5 // pred_check_branch
        %105 = sbr.rel (%p103) target = $region20
      $region19: #{tpu_custom_call.1} parent=5 // pred_region
        // Predicated region
        $region21: #{tpu_custom_call.1} parent=19 // pred_check
          %p106 = pneg %p31
        $region22: #{tpu_custom_call.1} parent=19 // pred_check_branch
          %108 = sbr.rel (%p106) target = $region24
        $region23: #{tpu_custom_call.1} parent=19 // pred_region
          %s109 = smul.u32 16, %s11
          %p110 = scmp.lt.s32.totalorder %s109, 31
          %s111 = scalar_select %p110, %s109, 31
          %s112 = smul.addr %s111, 4
          %s113 = scalar_lea.vmem %s0, %s112
          %s114 = smul.u32 16, %s11
        $region24: #{tpu_custom_call.1} parent=19 // pred_fallthru
          _
      $region20: #{tpu_custom_call.1} parent=5 // pred_fallthru
        _
      %p115 = scmp.le.s32.totalorder 1, %s11
      %p116 = scmp.lt.s32.totalorder %s11, 3
      %p117 = pnand %p115, %p116
      %p118 = pneg %p117
      // Predicated region
      $region25: #{tpu_custom_call.1} parent=5 // pred_check
        _
      $region26: #{tpu_custom_call.1} parent=5 // pred_check_branch
        %120 = sbr.rel (%p117) target = $region28
      $region27: #{tpu_custom_call.1} parent=5 // pred_region
        %s121 = ssub.s32 %s11, 1
        %s122 = smul.u32 16, %s16
        %p123 = scmp.lt.s32.totalorder %s122, 31
        %s124 = scalar_select %p123, %s122, 31
        %s125 = smul.addr %s124, 4
        %s126 = scalar_lea.vmem %s0, %s125
        %p127 = pneg %p37
        %p128 = pneg %p34
        %p129 = pneg %p58
        %p130 = pneg %p55
        %p131 = pneg %p84
        %p132 = pneg %p81
        %s133 = sand.u32 %s71, 1
        %s134 = scalar_lea.sflag [#allocation3], %s133
        %s135 = sand.u32 %s71, 1
        %s136 = smul.addr %s135, 64
        %s137 = scalar_lea.vmem [#allocation2], %s136
        %s138 = smul.u32 16, %s16
        %p139 = scmp.lt.s32.totalorder %s138, 31
        %s140 = scalar_select %p139, %s138, 31
        %s141 = smul.addr %s140, 4
        %s142 = scalar_lea.vmem %s0, %s141
        %s143 = smul.u32 16, %s16
        %s144 = smul.u32 16, %s16
        %v146 = vld [vmem:[%s142] sm:$0xf]
        %v147 = vld [vmem:[%s142 + $0x4] sm:$0xf]
        %v148 = vld [vmem:[%s142 + $0x8] sm:$0xf]
        %v149 = vld [vmem:[%s142 + $0xc] sm:$0xf]
        %v150 = vld [vmem:[%s142 + $0x10] sm:$0xf]
        %v151 = vld [vmem:[%s142 + $0x14] sm:$0xf]
        %v152 = vld [vmem:[%s142 + $0x18] sm:$0xf]
        %v153 = vld [vmem:[%s142 + $0x1c] sm:$0xf]
        %v154 = vld [vmem:[%s142 + $0x20] sm:$0xf]
        %v155 = vld [vmem:[%s142 + $0x24] sm:$0xf]
        %v156 = vld [vmem:[%s142 + $0x28] sm:$0xf]
        %v157 = vld [vmem:[%s142 + $0x2c] sm:$0xf]
        %v158 = vld [vmem:[%s142 + $0x30] sm:$0xf]
        %v159 = vld [vmem:[%s142 + $0x34] sm:$0xf]
        %v160 = vld [vmem:[%s142 + $0x38] sm:$0xf]
        %v161 = vld [vmem:[%s142 + $0x3c] sm:$0xf]
        %v162 = vld [vmem:[%s1] sm:$0xf]
        %v163 = vld [vmem:[%s1 + $0x4] sm:$0xf]
        %v164 = vld [vmem:[%s1 + $0x8] sm:$0xf]
        %v165 = vld [vmem:[%s1 + $0xc] sm:$0xf]
        %v166 = vld [vmem:[%s1 + $0x10] sm:$0xf]
        %v167 = vld [vmem:[%s1 + $0x14] sm:$0xf]
        %v184 = vunpack.c.l.b16 %v146
        %v185 = vunpack.c.l.b16 %v147
        %v186 = vunpack.c.l.b16 %v148
        %v187 = vunpack.c.l.b16 %v149
        %v188 = vunpack.c.l.b16 %v150
        %v189 = vunpack.c.l.b16 %v151
        %v190 = vunpack.c.l.b16 %v152
        %v191 = vunpack.c.l.b16 %v153
        %v192 = vunpack.c.l.b16 %v154
        %v193 = vunpack.c.l.b16 %v155
        %v194 = vunpack.c.l.b16 %v156
        %v195 = vunpack.c.l.b16 %v157
        %v196 = vunpack.c.l.b16 %v158
        %v197 = vunpack.c.l.b16 %v159
        %v198 = vunpack.c.l.b16 %v160
        %v199 = vunpack.c.l.b16 %v161
        %v200 = vpack.c.b16 %v185, %v184
        %v201 = vpack.c.b16 %v187, %v186
        %v202 = vpack.c.b16 %v189, %v188
        %v203 = vpack.c.b16 %v191, %v190
        %v204 = vpack.c.b16 %v193, %v192
        %v205 = vpack.c.b16 %v195, %v194
        %v206 = vpack.c.b16 %v197, %v196
        %v207 = vpack.c.b16 %v199, %v198
        %v214 = vunpack.c.l.b16 %v162
        %v215 = vunpack.c.l.b16 %v163
        %v216 = vunpack.c.l.b16 %v164
        %v217 = vunpack.c.l.b16 %v165
        %v218 = vunpack.c.l.b16 %v166
        %v219 = vunpack.c.l.b16 %v167
        %v220 = vpack.c.b16 %v215, %v214
        %v221 = vpack.c.b16 %v217, %v216
        %v222 = vpack.c.b16 %v219, %v218
        %vm226 = vcmask 392192
        %v228 = vsel %vm226, %v200, 0
        %v231 = vsel %vm226, %v201, 0
        %v234 = vsel %vm226, %v202, 0
        %v237 = vsel %vm226, %v203, 0
        %v240 = vsel %vm226, %v204, 0
        %v243 = vsel %vm226, %v205, 0
        %v246 = vsel %vm226, %v206, 0
        %v249 = vsel %vm226, %v207, 0
        %251 = vmatprep.subr.bf16.mxu0 0
        %252 = vmatpush1.bf16.msra.mxu0 0
        %253 = vmatprep.subr.bf16.mxu0 0
        %254 = vmatpush1.bf16.msra.mxu0 0
        %255 = vmatprep.subr.bf16.mxu0 0
        %256 = vmatpush1.bf16.msra.mxu0 0
        %257 = vmatprep.subr.bf16.mxu0 0
        %258 = vmatpush1.bf16.msra.mxu0 0
        %259 = vmatprep.subr.bf16.mxu0 0
        %260 = vmatpush1.bf16.msra.mxu0 0
        %261 = vmatprep.subr.bf16.mxu0 0
        %262 = vmatpush1.bf16.msra.mxu0 %v222
        %263 = vmatprep.subr.bf16.mxu0 0
        %264 = vmatpush1.bf16.msra.mxu0 %v221
        %265 = vmatprep.subr.bf16.mxu0 0
        %266 = vmatpush1.bf16.msra.mxu0 %v220
        %267 = vmatprep.subr.bf16.mxu0 0
        %268 = vmatpush2.bf16.msra.mxu0 0
        %269 = vmatprep.subr.bf16.mxu0 0
        %270 = vmatpush2.bf16.msra.mxu0 0
        %271 = vmatprep.subr.bf16.mxu0 0
        %272 = vmatpush2.bf16.msra.mxu0 0
        %273 = vmatprep.subr.bf16.mxu0 0
        %274 = vmatpush2.bf16.msra.mxu0 0
        %275 = vmatprep.subr.bf16.mxu0 0
        %276 = vmatpush2.bf16.msra.mxu0 0
        %277 = vmatprep.subr.bf16.mxu0 0
        %278 = vmatpush2.bf16.msra.mxu0 0
        %279 = vmatprep.subr.bf16.mxu0 0
        %280 = vmatpush2.bf16.msra.mxu0 0
        %281 = vmatprep.subr.bf16.mxu0 0
        %282 = vmatpush2.bf16.msra.mxu0 0
        %283 = vmatprep.mubr.bf16.mxu0 0
        %284 = vmatmul.mubr.bf16.gmra.mxu0 %v228
        %v285 = vpop.f32.mrf.mxu0
        %v286 = vadd.f32 0.0, %v285
        %v287 = vpop.f32.mrf.mxu0
        %v288 = vpop.f32.mrf.mxu0
        %v289 = vadd.f32 0.0, %v288
        %v290 = vpop.f32.mrf.mxu0
        %291 = vmatprep.mubr.bf16.mxu0 0
        %292 = vmatmul.mubr.bf16.gmra.mxu0 %v231
        %v293 = vpop.f32.mrf.mxu0
        %v294 = vadd.f32 0.0, %v293
        %v295 = vpop.f32.mrf.mxu0
        %v296 = vpop.f32.mrf.mxu0
        %v297 = vadd.f32 0.0, %v296
        %v298 = vpop.f32.mrf.mxu0
        %299 = vmatprep.mubr.bf16.mxu0 0
        %300 = vmatmul.mubr.bf16.gmra.mxu0 %v234
        %v301 = vpop.f32.mrf.mxu0
        %v302 = vadd.f32 0.0, %v301
        %v303 = vpop.f32.mrf.mxu0
        %v304 = vpop.f32.mrf.mxu0
        %v305 = vadd.f32 0.0, %v304
        %v306 = vpop.f32.mrf.mxu0
        %307 = vmatprep.mubr.bf16.mxu0 0
        %308 = vmatmul.mubr.bf16.gmra.mxu0 %v237
        %v309 = vpop.f32.mrf.mxu0
        %v310 = vadd.f32 0.0, %v309
        %v311 = vpop.f32.mrf.mxu0
        %v312 = vpop.f32.mrf.mxu0
        %v313 = vadd.f32 0.0, %v312
        %v314 = vpop.f32.mrf.mxu0
        %315 = vmatprep.mubr.bf16.mxu0 0
        %316 = vmatmul.mubr.bf16.gmra.mxu0 %v240
        %v317 = vpop.f32.mrf.mxu0
        %v318 = vadd.f32 0.0, %v317
        %v319 = vpop.f32.mrf.mxu0
        %v320 = vpop.f32.mrf.mxu0
        %v321 = vadd.f32 0.0, %v320
        %v322 = vpop.f32.mrf.mxu0
        %323 = vmatprep.mubr.bf16.mxu0 0
        %324 = vmatmul.mubr.bf16.gmra.mxu0 %v243
        %v325 = vpop.f32.mrf.mxu0
        %v326 = vadd.f32 0.0, %v325
        %v327 = vpop.f32.mrf.mxu0
        %v328 = vpop.f32.mrf.mxu0
        %v329 = vadd.f32 0.0, %v328
        %v330 = vpop.f32.mrf.mxu0
        %331 = vmatprep.mubr.bf16.mxu0 0
        %332 = vmatmul.mubr.bf16.gmra.mxu0 %v246
        %v333 = vpop.f32.mrf.mxu0
        %v334 = vadd.f32 0.0, %v333
        %v335 = vpop.f32.mrf.mxu0
        %v336 = vpop.f32.mrf.mxu0
        %v337 = vadd.f32 0.0, %v336
        %v338 = vpop.f32.mrf.mxu0
        %339 = vmatprep.mubr.bf16.mxu0 0
        %340 = vmatmul.mubr.bf16.gmra.mxu0 %v249
        %v341 = vpop.f32.mrf.mxu0
        %v342 = vadd.f32 0.0, %v341
        %v343 = vpop.f32.mrf.mxu0
        %v344 = vpop.f32.mrf.mxu0
        %v345 = vadd.f32 0.0, %v344
        %v346 = vpop.f32.mrf.mxu0
        %347 = vdwg.mxu0
        %v348 = vpack.c.bf16 %v289, %v286
        %v349 = vpack.c.bf16 %v297, %v294
        %v350 = vpack.c.bf16 %v305, %v302
        %v351 = vpack.c.bf16 %v313, %v310
        %v352 = vpack.c.bf16 %v321, %v318
        %v353 = vpack.c.bf16 %v329, %v326
        %v354 = vpack.c.bf16 %v337, %v334
        %v355 = vpack.c.bf16 %v345, %v342
        %v364 = vunpack.c.l.b16 %v348
        %v365 = vunpack.c.h.b16 %v348
        %v366 = vunpack.c.l.b16 %v349
        %v367 = vunpack.c.h.b16 %v349
        %v368 = vunpack.c.l.b16 %v350
        %v369 = vunpack.c.h.b16 %v350
        %v370 = vunpack.c.l.b16 %v351
        %v371 = vunpack.c.h.b16 %v351
        %v372 = vunpack.c.l.b16 %v352
        %v373 = vunpack.c.h.b16 %v352
        %v374 = vunpack.c.l.b16 %v353
        %v375 = vunpack.c.h.b16 %v353
        %v376 = vunpack.c.l.b16 %v354
        %v377 = vunpack.c.h.b16 %v354
        %v378 = vunpack.c.l.b16 %v355
        %v379 = vunpack.c.h.b16 %v355
        %v380 = vpack.c.b16 %v364, %v364
        %v381 = vpack.c.b16 %v365, %v365
        %v382 = vpack.c.b16 %v366, %v366
        %v383 = vpack.c.b16 %v367, %v367
        %v384 = vpack.c.b16 %v368, %v368
        %v385 = vpack.c.b16 %v369, %v369
        %v386 = vpack.c.b16 %v370, %v370
        %v387 = vpack.c.b16 %v371, %v371
        %v388 = vpack.c.b16 %v372, %v372
        %v389 = vpack.c.b16 %v373, %v373
        %v390 = vpack.c.b16 %v374, %v374
        %v391 = vpack.c.b16 %v375, %v375
        %v392 = vpack.c.b16 %v376, %v376
        %v393 = vpack.c.b16 %v377, %v377
        %v394 = vpack.c.b16 %v378, %v378
        %v395 = vpack.c.b16 %v379, %v379
        %412 = vst [vmem:[%s137] sm:$0xf] %v380
        %413 = vst [vmem:[%s137 + $0x4] sm:$0xf] %v381
        %414 = vst [vmem:[%s137 + $0x8] sm:$0xf] %v382
        %415 = vst [vmem:[%s137 + $0xc] sm:$0xf] %v383
        %416 = vst [vmem:[%s137 + $0x10] sm:$0xf] %v384
        %417 = vst [vmem:[%s137 + $0x14] sm:$0xf] %v385
        %418 = vst [vmem:[%s137 + $0x18] sm:$0xf] %v386
        %419 = vst [vmem:[%s137 + $0x1c] sm:$0xf] %v387
        %420 = vst [vmem:[%s137 + $0x20] sm:$0xf] %v388
        %421 = vst [vmem:[%s137 + $0x24] sm:$0xf] %v389
        %422 = vst [vmem:[%s137 + $0x28] sm:$0xf] %v390
        %423 = vst [vmem:[%s137 + $0x2c] sm:$0xf] %v391
        %424 = vst [vmem:[%s137 + $0x30] sm:$0xf] %v392
        %425 = vst [vmem:[%s137 + $0x34] sm:$0xf] %v393
        %426 = vst [vmem:[%s137 + $0x38] sm:$0xf] %v394
        %427 = vst [vmem:[%s137 + $0x3c] sm:$0xf] %v395
        %s428 = sand.u32 %s71, 1
        %s429 = scalar_lea.sflag [#allocation3], %s428
        %s430 = sand.u32 %s71, 1
        %s431 = smul.addr %s430, 64
        %s432 = scalar_lea.vmem [#allocation2], %s431
        // Predicated region
        $region29: #{tpu_custom_call.1} parent=27 // pred_check
          %p433 = pneg %p81
        $region30: #{tpu_custom_call.1} parent=27 // pred_check_branch
          %435 = sbr.rel (%p433) target = $region32
        $region31: #{tpu_custom_call.1} parent=27 // pred_region
          %s436 = smul.u32 16, %s16
          %s438 = ssub.s32 1024, 1024
          %439 = vsyncadd %s429, %s438
          %s440 = smul.addr %s436, 64
          %s441 = scalar_lea.hbm %s2, %s440
          %s442 = sshll.u32 %s432, 4
          %s443 = int_to_ptr.vmem [resolvable:$true] %s442
          %448 = dma.vmem_to_hbm [thread:$0]  %s443, 1024, %s441, %s429, 64, 64, 4
        $region32: #{tpu_custom_call.1} parent=27 // pred_fallthru
          _
      $region28: #{tpu_custom_call.1} parent=5 // pred_fallthru
        _
      %p449 = scmp.le.s32.totalorder 2, %s11
      // Predicated region
      $region33: #{tpu_custom_call.1} parent=5 // pred_check
        %p450 = pneg %p449
      $region34: #{tpu_custom_call.1} parent=5 // pred_check_branch
        %452 = sbr.rel (%p450) target = $region36
      $region35: #{tpu_custom_call.1} parent=5 // pred_region
        %s453 = ssub.s32 %s11, 2
        // Predicated region
        $region37: #{tpu_custom_call.1} parent=35 // pred_check
          %p454 = pneg %p87
        $region38: #{tpu_custom_call.1} parent=35 // pred_check_branch
          %456 = sbr.rel (%p454) target = $region40
        $region39: #{tpu_custom_call.1} parent=35 // pred_region
          %s457 = sand.u32 %s72, 1
          %s458 = scalar_lea.sflag [#allocation3], %s457
          %s459 = sand.u32 %s72, 1
          %s460 = smul.addr %s459, 64
          %s461 = scalar_lea.vmem [#allocation2], %s460
          %462 = dma.done %s458, 1024
        $region40: #{tpu_custom_call.1} parent=35 // pred_fallthru
          _
      $region36: #{tpu_custom_call.1} parent=5 // pred_fallthru
        _
    $region6: #{tpu_custom_call.1} parent=1 // loop_footer
      %s15 = sadd.s32 1, %s11
    $region7: #{tpu_custom_call.1} parent=1 // loop_footer_branch
      %10 = sbr.rel target = $region3
    $region8: #{tpu_custom_call.1} parent=1 // loop_exit
      _
    %463 = vsyncpa [#allocation3], 1
    %s464 = scalar_lea.sflag [#allocation3], 1
    %465 = vsyncpa %s464, 1

</llo_original>
